<compile_context>
chip_gen: v7x
topology: tpu7x:2x2x1
jax: 0.10.0
libtpu: 0.0.40
codegen_flags: <defaults>
</compile_context>

<pallas_src>
import functools
import math

import jax
import jax.numpy as jnp
from jax import lax
from jax.experimental import pallas as pl
from jax.experimental.pallas import tpu as pltpu

_BN_EPS = 1e-5
_LANE = 128


def _round_up(x, m):
    return (x + m - 1) // m * m


def _cdiv(a, b):
    return (a + b - 1) // b


# ----------------------------- Pallas kernels -----------------------------

def _mm_kernel(*refs, relu_pre, relu_post, has_res):
    """acc = x @ w + b ; [relu] ; [+res ; [relu]] ; store (bf16, lane-dense)."""
    if has_res:
        x_ref, w_ref, b_ref, res_ref, o_ref = refs
    else:
        x_ref, w_ref, b_ref, o_ref = refs
        res_ref = None
    acc = jnp.dot(x_ref[...], w_ref[...], preferred_element_type=jnp.float32)
    acc = acc + b_ref[...]
    if relu_pre:
        acc = jnp.maximum(acc, 0.0)
    if has_res:
        acc = acc + res_ref[...].astype(jnp.float32)
        if relu_post:
            acc = jnp.maximum(acc, 0.0)
    o_ref[...] = acc.astype(o_ref.dtype)


def _flat_conv_kernel(*refs, shifts, cin, tm, nsub, n_inner,
                      relu_pre, relu_post, has_res):
    """Stride-1 SAME conv as shifted-window tap accumulation.

    The padded activation lives in HBM as a flat (rows, C) bf16 matrix.  Each
    grid step owns a block of nsub*tm output rows; its row window (block + halo)
    is DMA'd into a 2-slot VMEM buffer that is double-buffered across the inner
    (sequential) grid axis.  Taps are sliced directly out of the bf16 window
    (static slices; no f32 staging copy) and accumulated on the MXU with an f32
    accumulator per tm-row sub-tile.
    """
    if has_res:
        x_hbm, w_ref, b_ref, res_ref, o_ref, buf, sem = refs
    else:
        x_hbm, w_ref, b_ref, o_ref, buf, sem = refs
        res_ref = None

    o_idx = pl.program_id(0)          # outer ("parallel") axis - megacore split
    i_idx = pl.program_id(1)          # inner ("arbitrary") axis - sequential
    bm = nsub * tm
    win = buf.shape[1]
    cout = o_ref.shape[-1]
    blk = o_idx * n_inner + i_idx     # global block index
    slot = i_idx % 2

    def fetch(block_idx, s):
        row0 = pl.multiple_of(block_idx * bm, 8)
        pltpu.make_async_copy(x_hbm.at[pl.ds(row0, win)], buf.at[s],
                              sem.at[s]).start()

    # Prime the first window of this core's inner sequence.
    @pl.when(i_idx == 0)
    def _():
        fetch(blk, slot)

    # Wait for this block's window, then prefetch the next one (double buffer).
    pltpu.make_async_copy(x_hbm.at[pl.ds(pl.multiple_of(blk * bm, 8), win)],
                          buf.at[slot], sem.at[slot]).wait()

    @pl.when(i_idx + 1 < n_inner)
    def _():
        fetch(blk + 1, 1 - slot)

    cur = buf.at[slot]
    # TODO(synk): pair taps along K (K=2*cin) to fill the 256-deep MXU on v6e/v7x.
    for s in range(nsub):
        base = s * tm
        acc = jnp.zeros((tm, cout), jnp.float32)
        for t, sh in enumerate(shifts):
            acc = acc + jnp.dot(cur[pl.ds(base + sh, tm), :],
                                w_ref[pl.ds(t * cin, cin), :],
                                preferred_element_type=jnp.float32)
        acc = acc + b_ref[...]
        if relu_pre:
            acc = jnp.maximum(acc, 0.0)
        if has_res:
            acc = acc + res_ref[pl.ds(base, tm), :].astype(jnp.float32)
            if relu_post:
                acc = jnp.maximum(acc, 0.0)
        o_ref[pl.ds(base, tm), :] = acc.astype(o_ref.dtype)


# ------------------------------ Tile choices -------------------------------

def _pick_tm_mm(M, cout):
    """Fixed-size M tile (f32 acc <= ~128KB); M is padded up to a multiple."""
    cap = max(32, min(256, ((128 * 1024) // (4 * max(cout, 128))) // 8 * 8))
    return min(cap, max(8, _round_up(M, 8)))


def _pick_flat_tiles(M, cout, halo):
    """(tm, nsub): f32 acc tile <= ~128KB; window covers nsub sub-tiles so the
    halo re-fetch is amortised toward 1x."""
    tm = max(32, min(256, ((128 * 1024) // (4 * max(cout, 128))) // 8 * 8))
    tm = min(tm, max(8, _round_up(M, 8)))
    nsub = max(1, min(8, _cdiv(4 * halo, tm), _cdiv(M, tm)))
    return tm, nsub


# ------------------------------ Pallas wrappers -----------------------------

@functools.partial(jax.jit, static_argnames=("relu_pre", "relu_post"))
def fused_matmul(x, w, b, res, *, relu_pre, relu_post):
    """out = epilogue(x @ w + b). x:(M,K) bf16, w:(K,Cout) bf16, b:(1,Cout) f32,
    res: optional (M,Cout) bf16."""
    M, K = x.shape
    Cout = w.shape[1]
    tm = _pick_tm_mm(M, Cout)
    M_pad = _round_up(M, tm)
    has_res = res is not None
    if M_pad != M:
        x = jnp.pad(x, ((0, M_pad - M), (0, 0)))
        if has_res:
            res = jnp.pad(res, ((0, M_pad - M), (0, 0)))

    in_specs = [
        pl.BlockSpec((tm, K), lambda i: (i, 0)),
        pl.BlockSpec((K, Cout), lambda i: (0, 0)),
        pl.BlockSpec((1, Cout), lambda i: (0, 0)),
    ]
    args = [x, w, b]
    if has_res:
        in_specs.append(pl.BlockSpec((tm, Cout), lambda i: (i, 0)))
        args.append(res)

    flops = 2 * M_pad * K * Cout
    bytes_acc = (M_pad * K + K * Cout + M_pad * Cout * (2 if has_res else 1)) * 2 + 4 * Cout
    out = pl.pallas_call(
        functools.partial(_mm_kernel, relu_pre=relu_pre, relu_post=relu_post,
                          has_res=has_res),
        out_shape=jax.ShapeDtypeStruct((M_pad, Cout), jnp.bfloat16),
        grid_spec=pltpu.PrefetchScalarGridSpec(
            num_scalar_prefetch=0,
            grid=(M_pad // tm,),
            in_specs=in_specs,
            out_specs=pl.BlockSpec((tm, Cout), lambda i: (i, 0)),
        ),
        compiler_params=pltpu.CompilerParams(dimension_semantics=("parallel",)),
        cost_estimate=pl.CostEstimate(flops=flops, transcendentals=0,
                                      bytes_accessed=bytes_acc),
    )(*args)
    return out[:M] if M_pad != M else out


@functools.partial(jax.jit, static_argnames=("k", "dilation", "relu_pre", "relu_post"))
def fused_conv_s1_flat(x, w, b, res, *, k, dilation, relu_pre, relu_post):
    """Stride-1 SAME kxk conv (dilation d) without HBM im2col.

    x:(N,H,W,Cin_pad) bf16, w:(k*k*Cin_pad, Cout_pad) bf16, b:(1,Cout_pad) f32,
    res: optional (N,H,W,Cout_pad) bf16.
    """
    N, H, W, C = x.shape
    Cout = w.shape[1]
    p = dilation * (k - 1) // 2
    Hp, Wp = H + 2 * p, W + 2 * p
    M_valid = N * Hp * Wp                       # conv evaluated on the padded grid
    shifts = tuple(i * dilation * Wp + j * dilation
                   for i in range(k) for j in range(k))
    halo = _round_up(max(shifts), 8)

    tm, nsub = _pick_flat_tiles(M_valid, Cout, halo)
    bm = nsub * tm
    n_blocks = _cdiv(M_valid, bm)
    n_outer = 2 if (n_blocks >= 2 and n_blocks % 2 == 0) else 1
    n_inner = n_blocks // n_outer
    M_out = n_blocks * bm
    win = bm + halo

    # Flat padded activation; single tail pad covers block alignment + the DMA
    # halo overrun of the last window (XLA fuses the pad+reshape+pad chain).
    xp = jnp.pad(x, ((0, 0), (p, p), (p, p), (0, 0))).reshape(M_valid, C)
    tail = M_out + halo - M_valid
    if tail:
        xp = jnp.pad(xp, ((0, tail), (0, 0)))

    has_res = res is not None
    args = [xp, w, b]
    in_specs = [
        pl.BlockSpec(memory_space=pl.ANY),                 # flat activation in HBM
        pl.BlockSpec((w.shape[0], Cout), lambda o, i: (0, 0)),
        pl.BlockSpec((1, Cout), lambda o, i: (0, 0)),
    ]
    if has_res:
        # TODO(synk): index the residual un-padded via its own layout / fuse the
        # upsample into this load to drop one wrapper HBM round trip.
        rp = jnp.pad(res, ((0, 0), (0, Hp - H), (0, Wp - W), (0, 0))).reshape(M_valid, Cout)
        if M_out != M_valid:
            rp = jnp.pad(rp, ((0, M_out - M_valid), (0, 0)))
        args.append(rp)
        in_specs.append(pl.BlockSpec((bm, Cout), lambda o, i: (o * n_inner + i, 0)))

    flops = 2 * M_out * (k * k * C) * Cout
    bytes_acc = (n_blocks * win * C + k * k * C * Cout
                 + M_out * Cout * (2 if has_res else 1)) * 2 + 4 * Cout
    out = pl.pallas_call(
        functools.partial(_flat_conv_kernel, shifts=shifts, cin=C, tm=tm,
                          nsub=nsub, n_inner=n_inner,
                          relu_pre=relu_pre, relu_post=relu_post, has_res=has_res),
        out_shape=jax.ShapeDtypeStruct((M_out, Cout), jnp.bfloat16),
        grid_spec=pltpu.PrefetchScalarGridSpec(
            num_scalar_prefetch=0,
            grid=(n_outer, n_inner),
            in_specs=in_specs,
            out_specs=pl.BlockSpec((bm, Cout), lambda o, i: (o * n_inner + i, 0)),
            scratch_shapes=[
                pltpu.VMEM((2, win, C), jnp.bfloat16),     # double-buffered window
                pltpu.SemaphoreType.DMA((2,)),
            ],
        ),
        compiler_params=pltpu.CompilerParams(
            dimension_semantics=("parallel", "arbitrary")),
        cost_estimate=pl.CostEstimate(flops=flops, transcendentals=0,
                                      bytes_accessed=bytes_acc),
    )(*args)
    out = out[:M_valid].reshape(N, Hp, Wp, Cout)[:, :H, :W, :]
    return out


# ------------------------------- Conv glue ---------------------------------

def _bn_fold(p):
    scale = p["gamma"] * lax.rsqrt(p["var"] + _BN_EPS)
    return p["w"] * scale, p["beta"] - p["mean"] * scale


def _pack_weight(w, b, in_segments, cout_pad):
    """(kh,kw,cin_real,cout) -> (kh*kw*cin_pad_total, cout_pad) bf16, bias f32."""
    kh, kw, cin, cout = w.shape
    parts, off = [], 0
    for real, padw in in_segments:
        seg = w[:, :, off:off + real, :]
        if padw > real:
            seg = jnp.pad(seg, ((0, 0), (0, 0), (0, padw - real), (0, 0)))
        parts.append(seg)
        off += real
    if off != cin:
        raise ValueError("in_segments do not match weight cin")
    w = jnp.concatenate(parts, axis=2) if len(parts) > 1 else parts[0]
    if cout_pad > cout:
        w = jnp.pad(w, ((0, 0), (0, 0), (0, 0), (0, cout_pad - cout)))
        b = jnp.pad(b, (0, cout_pad - cout))
    cin_tot = sum(s[1] for s in in_segments)
    w2 = w.reshape(kh * kw * cin_tot, cout_pad).astype(jnp.bfloat16)
    b2 = b.astype(jnp.float32).reshape(1, cout_pad)
    return w2, b2


def _im2col(x, kh, kw, stride, dilation, padding):
    """Fallback path (strided / tiny convs).  Tap order (kh, kw, C)."""
    N, H, W, C = x.shape
    xp = jnp.pad(x, ((0, 0), (padding, padding), (padding, padding), (0, 0)))
    Ho = (H + 2 * padding - dilation * (kh - 1) - 1) // stride + 1
    Wo = (W + 2 * padding - dilation * (kw - 1) - 1) // stride + 1
    cols = []
    for i in range(kh):
        for j in range(kw):
            r0, c0 = i * dilation, j * dilation
            cols.append(xp[:, r0:r0 + (Ho - 1) * stride + 1:stride,
                           c0:c0 + (Wo - 1) * stride + 1:stride, :])
    patches = jnp.concatenate(cols, axis=-1)
    return patches.reshape(N * Ho * Wo, kh * kw * C), (N, Ho, Wo)


def conv_bn(x, p, *, stride=1, padding=0, dilation=1, act=True,
            residual=None, residual_relu=False, in_segments=None,
            extra_scaled=None):
    """ConvModule (conv, BN folded) with a fused epilogue:
         y = conv(x) + b ; if act: y = relu(y)
         if residual is not None: y = y + residual ; if residual_relu: y = relu(y)
    `extra_scaled=(w1,b1)` folds a BN-folded 1x1 branch into the centre tap
    (RepVGG re-parameterisation)."""
    w4, b1 = _bn_fold(p)
    if extra_scaled is not None:
        ew, eb = extra_scaled
        kh0 = p["w"].shape[0]
        w4 = w4.at[kh0 // 2, kh0 // 2].add(ew[0, 0])
        b1 = b1 + eb
    kh, kw, cin, cout = p["w"].shape
    if in_segments is None:
        in_segments = ((cin, x.shape[-1]),)
    cout_pad = _round_up(cout, _LANE)
    w2, b2 = _pack_weight(w4, b1, in_segments, cout_pad)

    x = x.astype(jnp.bfloat16)
    res = None if residual is None else residual.astype(jnp.bfloat16)
    relu_pre, relu_post = bool(act), bool(residual_relu)
    N, H, W, _ = x.shape

    # 1x1 convs are plain matmuls (no im2col at all).
    if kh == 1 and kw == 1 and stride == 1 and padding == 0:
        out = fused_matmul(x.reshape(N * H * W, x.shape[-1]), w2, b2,
                           None if res is None else res.reshape(N * H * W, cout_pad),
                           relu_pre=relu_pre, relu_post=relu_post)
        return out.reshape(N, H, W, cout_pad)

    # Stride-1 SAME convs: flat shifted-window kernel (no HBM im2col) unless the
    # padded-grid waste exceeds ~1.5x (tiny deep-stage feature maps -> im2col).
    p_same = dilation * (kh - 1) // 2
    if (stride == 1 and kh == kw and padding == p_same
            and x.shape[-1] % _LANE == 0
            and (H + 2 * p_same) * (W + 2 * p_same) <= 1.5 * H * W):
        return fused_conv_s1_flat(x, w2, b2, res, k=kh, dilation=dilation,
                                  relu_pre=relu_pre, relu_post=relu_post)

    # Fallback: im2col + fused GEMM (strided convs / tiny dilated convs).
    patches, (N2, Ho, Wo) = _im2col(x, kh, kw, stride, dilation, padding)
    res2 = None if res is None else res.reshape(N2 * Ho * Wo, cout_pad)
    out = fused_matmul(patches, w2, b2, res2, relu_pre=relu_pre, relu_post=relu_post)
    return out.reshape(N2, Ho, Wo, cout_pad)


def _upsample_axis(x, axis, scale):
    """Gather-free bf16 upsample of one spatial axis (align_corners=False)."""
    size = x.shape[axis]
    nxt = jnp.concatenate([lax.slice_in_dim(x, 1, size, axis=axis),
                           lax.slice_in_dim(x, size - 1, size, axis=axis)], axis=axis)
    prv = jnp.concatenate([lax.slice_in_dim(x, 0, 1, axis=axis),
                           lax.slice_in_dim(x, 0, size - 1, axis=axis)], axis=axis)
    phases = []
    for r in range(scale):
        d = (r + 0.5) / scale - 0.5
        lo = math.floor(d)
        w_hi = d - lo
        a, b = (prv, x) if lo < 0 else (x, nxt)
        ph = (a.astype(jnp.float32) * (1.0 - w_hi)
              + b.astype(jnp.float32) * w_hi).astype(jnp.bfloat16)
        phases.append(ph)
    y = jnp.stack(phases, axis=axis + 1)
    shp = list(x.shape)
    shp[axis] = size * scale
    return y.reshape(shp)


def bilinear_upsample(x, scale):
    """F.interpolate(mode='bilinear', align_corners=False) on NHWC, integer scale.
    Per-phase shifted weighted sums (no gathers), bf16 in/out; XLA fuses it."""
    # TODO(synk): could be fused into the consuming conv's residual load.
    x = x.astype(jnp.bfloat16)
    x = _upsample_axis(x, 1, scale)
    return _upsample_axis(x, 2, scale)


# ------------------------------ Parameters ---------------------------------

def _conv_p(key, cin, cout, k):
    w = jax.random.normal(key, (k, k, cin, cout), jnp.float32) * (1.0 / math.sqrt(k * k * cin))
    ones = jnp.ones((cout,), jnp.float32)
    zeros = jnp.zeros((cout,), jnp.float32)
    return {"w": w, "gamma": ones, "beta": zeros, "mean": zeros, "var": ones}


def init_udm_params(seed=0, mid=64, out_ch=64, in_ch=3):
    base = jax.random.PRNGKey(seed)
    cnt = [0]

    def nk():
        k = jax.random.fold_in(base, cnt[0])
        cnt[0] += 1
        return k

    P = {}
    # TODO(synk): stand-in for the pretrained tf_efficientnet_lite3 backbone.
    P["bb_layer1"] = _conv_p(nk(), in_ch, 32, 3)    # stride 4
    P["bb_layer2"] = _conv_p(nk(), 32, 48, 3)       # stride 2
    P["bb_layer3_0"] = _conv_p(nk(), 48, 96, 3)     # stride 2
    P["bb_layer3_1"] = _conv_p(nk(), 96, 136, 3)    # stride 1
    P["bb_layer4_0"] = _conv_p(nk(), 136, 232, 3)   # stride 2
    P["bb_layer4_1"] = _conv_p(nk(), 232, 384, 3)   # stride 1

    P["down4_to_16"] = _conv_p(nk(), mid, 96, 5)
    P["down4_to_32"] = _conv_p(nk(), mid, 232, 5)
    P["compression8_to_4"] = _conv_p(nk(), 48, mid, 1)
    P["compression16_to_4"] = _conv_p(nk(), 136, mid, 1)
    P["layer4_1"] = _conv_p(nk(), 32, mid, 3)
    for name in ("layer4_2", "layer4_3", "layer4_4"):
        P[name] = {"conv_L0": _conv_p(nk(), mid, mid, 3),
                   "conv1_L1": _conv_p(nk(), mid, mid, 3)}
    P["appm"] = {
        "conv_l0": _conv_p(nk(), 384, mid, 1),
        "conv_l1_0": _conv_p(nk(), 384, mid, 3),
        "conv_l1_1": _conv_p(nk(), mid, mid, 3),
        "conv_l2_0": _conv_p(nk(), 384, mid, 3),
        "conv_l2_1": _conv_p(nk(), mid, mid, 3),
        "project_l": _conv_p(nk(), mid * 3, mid, 1),
    }
    for name in ("delta_conv_1", "delta_conv_2"):
        P[name] = {"delta_l": _conv_p(nk(), mid, mid, 3),
                   "proj_l": _conv_p(nk(), mid, mid, 3)}
    lateral, down, pan = [], [], []
    for idx in range(3):
        lateral.append(_conv_p(nk(), mid, mid, 1))
        down.append(_conv_p(nk(), mid if idx == 0 else out_ch, out_ch, 3))
        blocks = [{"conv3": _conv_p(nk(), out_ch, out_ch, 3),
                   "conv1": _conv_p(nk(), out_ch, out_ch, 1)} for _ in range(3)]
        pan.append({"conv1": _conv_p(nk(), mid + out_ch, out_ch, 1),
                    "conv2": _conv_p(nk(), mid + out_ch, out_ch, 1),
                    "blocks": blocks})
    P["lateral_convs"] = lateral
    P["downsample_convs"] = down
    P["pan_blocks"] = pan
    return P


# ------------------------------ Sub-modules --------------------------------

def cross_m(p, high, low):
    # h = relu(conv_L0(high) + low); relu+add fused into conv_L0's epilogue.
    h = conv_bn(high, p["conv_L0"], padding=2, dilation=2, act=False,
                residual=low, residual_relu=True)
    return conv_bn(h, p["conv1_L1"], padding=1, act=True)


def delta_m(p, x1, x2):
    y = conv_bn(x2, p["delta_l"], padding=2, dilation=2, act=False,
                residual=x1, residual_relu=True)
    return conv_bn(y, p["proj_l"], padding=1, act=True)


def appm_forward(p, x):
    out_0 = conv_bn(x, p["conv_l0"], act=True)
    s1 = conv_bn(x, p["conv_l1_0"], padding=2, dilation=2, act=True,
                 residual=out_0, residual_relu=False)          # out_0 + out_1_pre
    out_1 = conv_bn(s1, p["conv_l1_1"], padding=1, act=True)
    s2 = conv_bn(x, p["conv_l2_0"], padding=4, dilation=4, act=True,
                 residual=out_1, residual_relu=False)          # out_1 + out_2_pre
    out_2 = conv_bn(s2, p["conv_l2_1"], padding=1, act=True)
    cat = jnp.concatenate([out_0, out_1, out_2], axis=-1)
    mid_r = p["conv_l0"]["w"].shape[3]
    segs = tuple((mid_r, t.shape[-1]) for t in (out_0, out_1, out_2))
    return conv_bn(cat, p["project_l"], act=True, in_segments=segs)


def repvgg_block(p, x):
    # relu(conv3_bn(x) + conv1_bn(x)); 1x1 branch folded into the 3x3 centre tap.
    w1, b1 = _bn_fold(p["conv1"])
    return conv_bn(x, p["conv3"], padding=1, act=True, extra_scaled=(w1, b1))


def csp_rep_layer(p, x, in_segments):
    x1 = conv_bn(x, p["conv1"], act=True, in_segments=in_segments)
    for blk in p["blocks"]:
        x1 = repvgg_block(blk, x1)
    # x_1 + conv2(x); conv3 is nn.Identity (hidden == out); add fused into conv2.
    return conv_bn(x, p["conv2"], act=True, in_segments=in_segments,
                   residual=x1, residual_relu=False)


# -------------------------------- Forward ----------------------------------

def udm_forward(P, x_nchw, out_strides=(16, 32)):
    x = jnp.transpose(x_nchw, (0, 2, 3, 1)).astype(jnp.bfloat16)   # NCHW -> NHWC

    # stand-in backbone stages (see TODO(synk) in init_udm_params)
    x4 = conv_bn(x, P["bb_layer1"], stride=4, padding=1, act=True)             # /4
    out_layer_1 = conv_bn(x4, P["layer4_1"], padding=1, act=True)
    x8 = conv_bn(x4, P["bb_layer2"], stride=2, padding=1, act=True)            # /8
    c8 = conv_bn(x8, P["compression8_to_4"], act=True)
    out_layer_2 = cross_m(P["layer4_2"], out_layer_1, bilinear_upsample(c8, 2))

    x16a = conv_bn(x8, P["bb_layer3_0"], stride=2, padding=1, act=True)        # /16
    x16 = conv_bn(out_layer_2, P["down4_to_16"], stride=4, padding=1, act=False,
                  residual=x16a, residual_relu=True)      # relu(x16 + down(out2))
    x16 = conv_bn(x16, P["bb_layer3_1"], padding=1, act=True)
    c16 = conv_bn(x16, P["compression16_to_4"], act=True)
    out_layer_3 = cross_m(P["layer4_3"], out_layer_2, bilinear_upsample(c16, 4))

    x32a = conv_bn(x16, P["bb_layer4_0"], stride=2, padding=1, act=True)       # /32
    x32 = conv_bn(out_layer_3, P["down4_to_32"], stride=8, padding=1, act=False,
                  residual=x32a, residual_relu=True)
    x32 = conv_bn(x32, P["bb_layer4_1"], padding=1, act=True)
    x32 = appm_forward(P["appm"], x32)
    c32 = x32
    out_layer_4 = cross_m(P["layer4_4"], out_layer_3, bilinear_upsample(c32, 8))

    # delta_mode
    out_layer_4 = delta_m(P["delta_conv_1"], out_layer_4, out_layer_3)
    out_layer_4 = delta_m(P["delta_conv_2"], out_layer_4, out_layer_2)

    # pan_mode
    out_list = [out_layer_4]
    out = out_layer_4
    out_r = P["downsample_convs"][0]["w"].shape[3]    # 64 real channels
    mid_r = P["lateral_convs"][0]["w"].shape[2]       # 64 real channels
    for idx in range(3):
        c_lat = (c8, c16, c32)[idx]
        d = conv_bn(out, P["downsample_convs"][idx], stride=2, padding=1, act=True)
        lat = conv_bn(c_lat, P["lateral_convs"][idx], act=True)
        cat = jnp.concatenate([d, lat], axis=-1)
        segs = ((out_r, d.shape[-1]), (mid_r, lat.shape[-1]))
        out = csp_rep_layer(P["pan_blocks"][idx], cat, segs)
        out_list.append(out)

    index_map = {4: 0, 8: 1, 16: 2, 32: 3}
    outs = [out_list[index_map[s]] for s in out_strides]
    # drop zero pad channels, back to NCHW f32 to match the PyTorch module
    return [jnp.transpose(o[..., :out_r], (0, 3, 1, 2)).astype(jnp.float32)
            for o in outs]


if __name__ == "__main__":
    key = jax.random.PRNGKey(0)
    x = jax.random.normal(key, (2, 3, 64, 64), jnp.float32)   # NCHW like PyTorch
    params = init_udm_params(seed=0)
    fwd = jax.jit(lambda P, xx: udm_forward(P, xx))
    outs = fwd(params, x)
    for o in outs:
        jax.block_until_ready(o)
    assert outs[0].shape == (2, 64, 4, 4), outs[0].shape     # stride-16 feature
    assert outs[1].shape == (2, 64, 2, 2), outs[1].shape     # stride-32 feature
    print("KERNEL_OK")
</pallas_src>

<mosaic_0001>
module attributes {stable_mosaic.version = 11 : i64} {
  func.func @_mm_kernel(%arg0: i32, %arg1: memref<256x27xbf16, #tpu.memory_space<vmem>>, %arg2: memref<27x128xbf16, #tpu.memory_space<vmem>>, %arg3: memref<1x128xf32, #tpu.memory_space<vmem>>, %arg4: memref<256x128xbf16, #tpu.memory_space<vmem>>) attributes {dimension_semantics = [#tpu.dimension_semantics<parallel>], iteration_bounds = array<i64: 2>, scalar_prefetch = 0 : i64, scratch_operands = 0 : i64, tpu.core_type = #tpu.core_type<tc>, window_params = [{transform_indices = @transform_0, window_bounds = array<i64: 256, 27>}, {pipeline_mode = #tpu.pipeline_mode<synchronous>, transform_indices = @transform_1, window_bounds = array<i64: 27, 128>}, {pipeline_mode = #tpu.pipeline_mode<synchronous>, transform_indices = @transform_2, window_bounds = array<i64: 1, 128>}, {transform_indices = @transform_3, window_bounds = array<i64: 256, 128>}]} {
    %c0 = arith.constant 0 : index
    %c0_0 = arith.constant 0 : index
    %0 = vector.load %arg1[%c0, %c0_0] : memref<256x27xbf16, #tpu.memory_space<vmem>>, vector<256x27xbf16>
    %c0_1 = arith.constant 0 : index
    %c0_2 = arith.constant 0 : index
    %1 = vector.load %arg2[%c0_1, %c0_2] : memref<27x128xbf16, #tpu.memory_space<vmem>>, vector<27x128xbf16>
    %cst = arith.constant dense<0.000000e+00> : vector<256x128xf32>
    %2 = tpu.matmul %0, %1, %cst {dimension_numbers = #tpu.dot_dimension_numbers<[1], [0], [0], [1], [0, 0, 1, 1], [], []>} : vector<256x27xbf16>, vector<27x128xbf16>, vector<256x128xf32> -> vector<256x128xf32>
    %c0_3 = arith.constant 0 : index
    %c0_4 = arith.constant 0 : index
    %3 = vector.load %arg3[%c0_3, %c0_4] : memref<1x128xf32, #tpu.memory_space<vmem>>, vector<1x128xf32>
    %4 = vector.broadcast %3 : vector<1x128xf32> to vector<256x128xf32>
    %5 = arith.addf %2, %4 : vector<256x128xf32>
    %cst_5 = arith.constant 0.000000e+00 : f32
    %6 = vector.broadcast %cst_5 : f32 to vector<256x128xf32>
    %7 = arith.maximumf %5, %6 : vector<256x128xf32>
    %8 = arith.truncf %7 : vector<256x128xf32> to vector<256x128xbf16>
    %c0_6 = arith.constant 0 : index
    %c0_7 = arith.constant 0 : index
    %9 = vector.load %arg4[%c0_6, %c0_7] : memref<256x128xbf16, #tpu.memory_space<vmem>>, vector<256x128xbf16>
    tpu.vector_store %arg4[%c0_6, %c0_7], %8 {strides = array<i32>} : memref<256x128xbf16, #tpu.memory_space<vmem>>, vector<256x128xbf16>,
    return
  }
  func.func @transform_0(%arg0: i32) -> (i32, i32) {
    %c0_i32 = arith.constant 0 : i32
    %c0_i32_0 = arith.constant 0 : i32
    return %arg0, %c0_i32 : i32, i32
  }
  func.func @transform_1(%arg0: i32) -> (i32, i32) {
    %c0_i32 = arith.constant 0 : i32
    %c0_i32_0 = arith.constant 0 : i32
    %c0_i32_1 = arith.constant 0 : i32
    return %c0_i32, %c0_i32_0 : i32, i32
  }
  func.func @transform_2(%arg0: i32) -> (i32, i32) {
    %c0_i32 = arith.constant 0 : i32
    %c0_i32_0 = arith.constant 0 : i32
    %c0_i32_1 = arith.constant 0 : i32
    return %c0_i32, %c0_i32_0 : i32, i32
  }
  func.func @transform_3(%arg0: i32) -> (i32, i32) {
    %c0_i32 = arith.constant 0 : i32
    %c0_i32_0 = arith.constant 0 : i32
    return %arg0, %c0_i32 : i32, i32
  }
}

</mosaic_0001>

<llo_original>
// kernel: fused_matmul.1
$region0: #{fused_matmul.1}
  #allocation0 [shape = 'u32[]', space=smem, size = 0x4, offset = 0x4, fixed_abs, tag = 'smem constant byte address 0x4 - core index']
  #allocation1 [shape = 'u32[144,128]{1,0:T(1,128)}', space=vmem, size = 0x12000, scoped, tag = 'internal scratch']
  %s0 = inlined_call_operand.vmem [shape: bf16[512,27], index: 0, kind: input, shape index: {}]
  %s1 = inlined_call_operand.vmem [shape: bf16[27,128], index: 1, kind: input, shape index: {}]
  %s2 = inlined_call_operand.vmem [shape: f32[1,128], index: 2, kind: input, shape index: {}]
  %s3 = inlined_call_operand.hbm [shape: bf16[512,128], index: 3, kind: output, shape index: {}]
  %s4 = sld [smem:[#allocation0]]
  $region45: #{fused_matmul.1} parent=0
    _
  %s6 = ssub.s32 1, %s4
  %s7 = scalar_select 0, %s6, %s4
  $region1: #{fused_matmul.1} parent=0
    #allocation2 [shape = 'u8[131072]{0}', space=vmem, size = 0x20000, scoped, tag = 'output window, operand 0']
    #allocation3 [shape = 's32[2]{0}', space=sflag, size = 0x8, scoped, tag = 'scoped memory for fused_matmul.1']
    %8 = vsyncpa [#allocation3], 0
    %s9 = scalar_lea.sflag [#allocation3], 1
    %10 = vsyncpa %s9, 0
    loop: start=0, step=1, limit=4
    $region2: #{fused_matmul.1} parent=1 // loop_pre_header
      _
    $region3: #{fused_matmul.1} parent=1 // loop_header
      %s12 = sphi 0, %s16
      %p13 = scmp.ge.s32.totalorder %s12, 4
      %s22 = sphi 0, %s24
      %s25 = sphi 0, %s22
      %s26 = sphi 0, %s25
      %s42 = sphi 0, %s26
      %s46 = sphi 0, %s46
      %s48 = sphi 0, %s46
      %s49 = sphi 0, %s48
      %s63 = sphi 0, %s49
      %s67 = sphi 0, %s67
      %s69 = sphi 0, %s67
      %s70 = sphi 0, %s69
      %s84 = sphi 0, %s70
      %s90 = sphi 0, %s92
      %s93 = sphi 0, %s90
      %s94 = sphi 0, %s93
      %s110 = sphi 0, %s94
    $region4: #{fused_matmul.1} parent=1 // loop_header_branch
      %15 = sbr.rel (%p13) target = $region8
    $region5: #{fused_matmul.1} parent=1 // loop_body
      %s17 = ssub.s32 %s12, 1
      %s18 = ssub.s32 %s12, 2
      %s19 = sadd.s32 %s12, 1
      %s20 = ssub.s32 %s12, %s19
      %p21 = scmp.eq.s32.totalorder %s20, 0
      %s23 = sadd.s32 %s22, 1
      %s24 = scalar_select %p21, %s22, %s23
      %p27 = pneg %p21
      %p28 = scmp.eq.s32.totalorder %s12, 1
      %p29 = por %p27, %p28
      %p30 = scmp.ne.s32.totalorder %s22, %s25
      %p31 = scmp.eq.s32.totalorder %s12, 0
      %p32 = por %p30, %p31
      %p33 = scmp.ne.s32.totalorder %s22, %s25
      %p34 = scmp.eq.s32.totalorder %s17, 1
      %p35 = por %p33, %p34
      %p36 = scmp.ne.s32.totalorder %s25, %s26
      %p37 = scmp.eq.s32.totalorder %s17, 0
      %p38 = por %p36, %p37
      %p39 = scmp.ne.s32.totalorder %s25, %s26
      %p40 = scmp.eq.s32.totalorder %s18, 1
      %p41 = por %p39, %p40
      %p43 = scmp.ne.s32.totalorder %s26, %s42
      %p44 = scmp.eq.s32.totalorder %s18, 0
      %p45 = por %p43, %p44
      %s47 = sadd.s32 %s46, 1
      %p50 = scmp.eq.s32.totalorder %s12, 1
      %p51 = scmp.ne.s32.totalorder %s46, %s48
      %p52 = scmp.eq.s32.totalorder %s12, 0
      %p53 = por %p51, %p52
      %p54 = scmp.ne.s32.totalorder %s46, %s48
      %p55 = scmp.eq.s32.totalorder %s17, 1
      %p56 = por %p54, %p55
      %p57 = scmp.ne.s32.totalorder %s48, %s49
      %p58 = scmp.eq.s32.totalorder %s17, 0
      %p59 = por %p57, %p58
      %p60 = scmp.ne.s32.totalorder %s48, %s49
      %p61 = scmp.eq.s32.totalorder %s18, 1
      %p62 = por %p60, %p61
      %p64 = scmp.ne.s32.totalorder %s49, %s63
      %p65 = scmp.eq.s32.totalorder %s18, 0
      %p66 = por %p64, %p65
      %s68 = sadd.s32 %s67, 1
      %p71 = scmp.eq.s32.totalorder %s12, 1
      %p72 = scmp.ne.s32.totalorder %s67, %s69
      %p73 = scmp.eq.s32.totalorder %s12, 0
      %p74 = por %p72, %p73
      %p75 = scmp.ne.s32.totalorder %s67, %s69
      %p76 = scmp.eq.s32.totalorder %s17, 1
      %p77 = por %p75, %p76
      %p78 = scmp.ne.s32.totalorder %s69, %s70
      %p79 = scmp.eq.s32.totalorder %s17, 0
      %p80 = por %p78, %p79
      %p81 = scmp.ne.s32.totalorder %s69, %s70
      %p82 = scmp.eq.s32.totalorder %s18, 1
      %p83 = por %p81, %p82
      %p85 = scmp.ne.s32.totalorder %s70, %s84
      %p86 = scmp.eq.s32.totalorder %s18, 0
      %p87 = por %p85, %p86
      %s88 = ssub.s32 %s12, %s19
      %p89 = scmp.eq.s32.totalorder %s88, 0
      %s91 = sadd.s32 %s90, 1
      %s92 = scalar_select %p89, %s90, %s91
      %p95 = pneg %p89
      %p96 = scmp.eq.s32.totalorder %s12, 1
      %p97 = por %p95, %p96
      %p98 = scmp.ne.s32.totalorder %s90, %s93
      %p99 = scmp.eq.s32.totalorder %s12, 0
      %p100 = por %p98, %p99
      %p101 = scmp.ne.s32.totalorder %s90, %s93
      %p102 = scmp.eq.s32.totalorder %s17, 1
      %p103 = por %p101, %p102
      %p104 = scmp.ne.s32.totalorder %s93, %s94
      %p105 = scmp.eq.s32.totalorder %s17, 0
      %p106 = por %p104, %p105
      %p107 = scmp.ne.s32.totalorder %s93, %s94
      %p108 = scmp.eq.s32.totalorder %s18, 1
      %p109 = por %p107, %p108
      %p111 = scmp.ne.s32.totalorder %s94, %s110
      %p112 = scmp.eq.s32.totalorder %s18, 0
      %p113 = por %p111, %p112
      %p114 = scmp.le.s32.totalorder 1, %s12
      %p115 = scmp.lt.s32.totalorder %s12, 3
      %p116 = pnand %p114, %p115
      %p117 = pneg %p116
      // Predicated region
      $region9: #{fused_matmul.1} parent=5 // pred_check
        _
      $region10: #{fused_matmul.1} parent=5 // pred_check_branch
        %119 = sbr.rel (%p116) target = $region12
      $region11: #{fused_matmul.1} parent=5 // pred_region
        %s120 = ssub.s32 %s12, 1
        // Predicated region
        $region13: #{fused_matmul.1} parent=11 // pred_check
          %p121 = pneg %p59
        $region14: #{fused_matmul.1} parent=11 // pred_check_branch
          %123 = sbr.rel (%p121) target = $region16
        $region15: #{fused_matmul.1} parent=11 // pred_region
          _
        $region16: #{fused_matmul.1} parent=11 // pred_fallthru
          _
        // Predicated region
        $region17: #{fused_matmul.1} parent=11 // pred_check
          %p124 = pneg %p80
        $region18: #{fused_matmul.1} parent=11 // pred_check_branch
          %126 = sbr.rel (%p124) target = $region20
        $region19: #{fused_matmul.1} parent=11 // pred_region
          _
        $region20: #{fused_matmul.1} parent=11 // pred_fallthru
          _
      $region12: #{fused_matmul.1} parent=5 // pred_fallthru
        _
      %p127 = scmp.lt.s32.totalorder %s12, 2
      // Predicated region
      $region21: #{fused_matmul.1} parent=5 // pred_check
        %p128 = pneg %p127
      $region22: #{fused_matmul.1} parent=5 // pred_check_branch
        %130 = sbr.rel (%p128) target = $region24
      $region23: #{fused_matmul.1} parent=5 // pred_region
        // Predicated region
        $region25: #{fused_matmul.1} parent=23 // pred_check
          %p131 = pneg %p32
        $region26: #{fused_matmul.1} parent=23 // pred_check_branch
          %133 = sbr.rel (%p131) target = $region28
        $region27: #{fused_matmul.1} parent=23 // pred_region
          %s134 = smul.u32 32, %s12
          %p135 = scmp.lt.s32.totalorder %s134, 63
          %s136 = scalar_select %p135, %s134, 63
          %s137 = smul.addr %s136, 4
          %s138 = scalar_lea.vmem %s0, %s137
          %s139 = smul.u32 32, %s12
        $region28: #{fused_matmul.1} parent=23 // pred_fallthru
          _
      $region24: #{fused_matmul.1} parent=5 // pred_fallthru
        _
      %p140 = scmp.le.s32.totalorder 1, %s12
      %p141 = scmp.lt.s32.totalorder %s12, 3
      %p142 = pnand %p140, %p141
      %p143 = pneg %p142
      // Predicated region
      $region29: #{fused_matmul.1} parent=5 // pred_check
        _
      $region30: #{fused_matmul.1} parent=5 // pred_check_branch
        %145 = sbr.rel (%p142) target = $region32
      $region31: #{fused_matmul.1} parent=5 // pred_region
        %s146 = ssub.s32 %s12, 1
        %s147 = smul.u32 32, %s17
        %p148 = scmp.lt.s32.totalorder %s147, 63
        %s149 = scalar_select %p148, %s147, 63
        %s150 = smul.addr %s149, 4
        %s151 = scalar_lea.vmem %s0, %s150
        %p152 = pneg %p38
        %p153 = pneg %p35
        %p154 = pneg %p59
        %p155 = pneg %p56
        %p156 = pneg %p80
        %p157 = pneg %p77
        %p158 = pneg %p106
        %p159 = pneg %p103
        %s160 = sand.u32 %s93, 1
        %s161 = scalar_lea.sflag [#allocation3], %s160
        %s162 = sand.u32 %s93, 1
        %s163 = smul.addr %s162, 128
        %s164 = scalar_lea.vmem [#allocation2], %s163
        %s165 = smul.u32 32, %s17
        %p166 = scmp.lt.s32.totalorder %s165, 63
        %s167 = scalar_select %p166, %s165, 63
        %s168 = smul.addr %s167, 4
        %s169 = scalar_lea.vmem %s0, %s168
        %s170 = smul.u32 32, %s17
        %s171 = smul.u32 32, %s17
        %v173 = vld [vmem:[%s169] sm:$0xf]
        %v174 = vld [vmem:[%s169 + $0x4] sm:$0xf]
        %v175 = vld [vmem:[%s169 + $0x8] sm:$0xf]
        %v176 = vld [vmem:[%s169 + $0xc] sm:$0xf]
        %v177 = vld [vmem:[%s169 + $0x10] sm:$0xf]
        %v178 = vld [vmem:[%s169 + $0x14] sm:$0xf]
        %v179 = vld [vmem:[%s169 + $0x18] sm:$0xf]
        %v180 = vld [vmem:[%s169 + $0x1c] sm:$0xf]
        %v181 = vld [vmem:[%s169 + $0x20] sm:$0xf]
        %v182 = vld [vmem:[%s169 + $0x24] sm:$0xf]
        %v183 = vld [vmem:[%s169 + $0x28] sm:$0xf]
        %v184 = vld [vmem:[%s169 + $0x2c] sm:$0xf]
        %v185 = vld [vmem:[%s169 + $0x30] sm:$0xf]
        %v186 = vld [vmem:[%s169 + $0x34] sm:$0xf]
        %v187 = vld [vmem:[%s169 + $0x38] sm:$0xf]
        %v188 = vld [vmem:[%s169 + $0x3c] sm:$0xf]
        %v189 = vld [vmem:[%s169 + $0x40] sm:$0xf]
        %v190 = vld [vmem:[%s169 + $0x44] sm:$0xf]
        %v191 = vld [vmem:[%s169 + $0x48] sm:$0xf]
        %v192 = vld [vmem:[%s169 + $0x4c] sm:$0xf]
        %v193 = vld [vmem:[%s169 + $0x50] sm:$0xf]
        %v194 = vld [vmem:[%s169 + $0x54] sm:$0xf]
        %v195 = vld [vmem:[%s169 + $0x58] sm:$0xf]
        %v196 = vld [vmem:[%s169 + $0x5c] sm:$0xf]
        %v197 = vld [vmem:[%s169 + $0x60] sm:$0xf]
        %v198 = vld [vmem:[%s169 + $0x64] sm:$0xf]
        %v199 = vld [vmem:[%s169 + $0x68] sm:$0xf]
        %v200 = vld [vmem:[%s169 + $0x6c] sm:$0xf]
        %v201 = vld [vmem:[%s169 + $0x70] sm:$0xf]
        %v202 = vld [vmem:[%s169 + $0x74] sm:$0xf]
        %v203 = vld [vmem:[%s169 + $0x78] sm:$0xf]
        %v204 = vld [vmem:[%s169 + $0x7c] sm:$0xf]
        %v205 = vld [vmem:[%s1] sm:$0xf]
        %v206 = vld [vmem:[%s1 + $0x4] sm:$0xf]
        %v207 = vld [vmem:[%s1 + $0x8] sm:$0xf]
        %v208 = vld [vmem:[%s1 + $0xc] sm:$0x3]
        %v209 = vld [vmem:[%s2] sm:$0x1]
        %v211 = vlaneseq
        %v212 = vshrl.u32 %v211, 7
        %v213 = vsub.s32 0, %v212
        %v214 = vrot.slane %v209, %v213
        %v248 = vunpack.c.l.b16 %v173
        %v249 = vunpack.c.l.b16 %v174
        %v250 = vunpack.c.l.b16 %v175
        %v251 = vunpack.c.l.b16 %v176
        %v252 = vunpack.c.l.b16 %v177
        %v253 = vunpack.c.l.b16 %v178
        %v254 = vunpack.c.l.b16 %v179
        %v255 = vunpack.c.l.b16 %v180
        %v256 = vunpack.c.l.b16 %v181
        %v257 = vunpack.c.l.b16 %v182
        %v258 = vunpack.c.l.b16 %v183
        %v259 = vunpack.c.l.b16 %v184
        %v260 = vunpack.c.l.b16 %v185
        %v261 = vunpack.c.l.b16 %v186
        %v262 = vunpack.c.l.b16 %v187
        %v263 = vunpack.c.l.b16 %v188
        %v264 = vunpack.c.l.b16 %v189
        %v265 = vunpack.c.l.b16 %v190
        %v266 = vunpack.c.l.b16 %v191
        %v267 = vunpack.c.l.b16 %v192
        %v268 = vunpack.c.l.b16 %v193
        %v269 = vunpack.c.l.b16 %v194
        %v270 = vunpack.c.l.b16 %v195
        %v271 = vunpack.c.l.b16 %v196
        %v272 = vunpack.c.l.b16 %v197
        %v273 = vunpack.c.l.b16 %v198
        %v274 = vunpack.c.l.b16 %v199
        %v275 = vunpack.c.l.b16 %v200
        %v276 = vunpack.c.l.b16 %v201
        %v277 = vunpack.c.l.b16 %v202
        %v278 = vunpack.c.l.b16 %v203
        %v279 = vunpack.c.l.b16 %v204
        %v280 = vpack.c.b16 %v249, %v248
        %v281 = vpack.c.b16 %v251, %v250
        %v282 = vpack.c.b16 %v253, %v252
        %v283 = vpack.c.b16 %v255, %v254
        %v284 = vpack.c.b16 %v257, %v256
        %v285 = vpack.c.b16 %v259, %v258
        %v286 = vpack.c.b16 %v261, %v260
        %v287 = vpack.c.b16 %v263, %v262
        %v288 = vpack.c.b16 %v265, %v264
        %v289 = vpack.c.b16 %v267, %v266
        %v290 = vpack.c.b16 %v269, %v268
        %v291 = vpack.c.b16 %v271, %v270
        %v292 = vpack.c.b16 %v273, %v272
        %v293 = vpack.c.b16 %v275, %v274
        %v294 = vpack.c.b16 %v277, %v276
        %v295 = vpack.c.b16 %v279, %v278
        %v300 = vunpack.c.l.b16 %v205
        %v301 = vunpack.c.l.b16 %v206
        %v302 = vunpack.c.l.b16 %v207
        %v303 = vunpack.c.l.b16 %v208
        %v304 = vpack.c.b16 %v301, %v300
        %v305 = vpack.c.b16 %v303, %v302
        %vm307 = vcmask 220160
        %v309 = vsel %vm307, %v280, 0
        %v312 = vsel %vm307, %v281, 0
        %v315 = vsel %vm307, %v282, 0
        %v318 = vsel %vm307, %v283, 0
        %v321 = vsel %vm307, %v284, 0
        %v324 = vsel %vm307, %v285, 0
        %v327 = vsel %vm307, %v286, 0
        %v330 = vsel %vm307, %v287, 0
        %v333 = vsel %vm307, %v288, 0
        %v336 = vsel %vm307, %v289, 0
        %v339 = vsel %vm307, %v290, 0
        %v342 = vsel %vm307, %v291, 0
        %v345 = vsel %vm307, %v292, 0
        %v348 = vsel %vm307, %v293, 0
        %v351 = vsel %vm307, %v294, 0
        %v354 = vsel %vm307, %v295, 0
        %vm356 = vcmask 1044480
        %vm357 = vcmask 1045504
        %v358 = vsel %vm356, 4294967295, 65535
        %v359 = vsel %vm357, %v358, 0
        %v361 = vand.u32 %v305, %v359
        %363 = vmatprep.subr.bf16.mxu0 0
        %364 = vmatpush1.bf16.msra.mxu0 %v304
        %365 = vmatprep.subr.bf16.mxu0 0
        %366 = vmatpush1.bf16.msra.mxu0 %v361
        %367 = vmatprep.subr.bf16.mxu0 0
        %368 = vmatpush1.bf16.msra.mxu0 0
        %369 = vmatprep.subr.bf16.mxu0 0
        %370 = vmatpush1.bf16.msra.mxu0 0
        %371 = vmatprep.subr.bf16.mxu0 0
        %372 = vmatpush1.bf16.msra.mxu0 0
        %373 = vmatprep.subr.bf16.mxu0 0
        %374 = vmatpush1.bf16.msra.mxu0 0
        %375 = vmatprep.subr.bf16.mxu0 0
        %376 = vmatpush1.bf16.msra.mxu0 0
        %377 = vmatprep.subr.bf16.mxu0 0
        %378 = vmatpush1.bf16.msra.mxu0 0
        %379 = vmatprep.subr.bf16.mxu0 0
        %380 = vmatpush1.bf16.msra.mxu0 0
        %381 = vmatprep.subr.bf16.mxu0 0
        %382 = vmatpush1.bf16.msra.mxu0 0
        %383 = vmatprep.subr.bf16.mxu0 0
        %384 = vmatpush1.bf16.msra.mxu0 0
        %385 = vmatprep.subr.bf16.mxu0 0
        %386 = vmatpush1.bf16.msra.mxu0 0
        %387 = vmatprep.subr.bf16.mxu0 0
        %388 = vmatpush1.bf16.msra.mxu0 0
        %389 = vmatprep.subr.bf16.mxu0 0
        %390 = vmatpush1.bf16.msra.mxu0 0
        %391 = vmatprep.subr.bf16.mxu0 0
        %392 = vmatpush1.bf16.msra.mxu0 0
        %393 = vmatprep.subr.bf16.mxu0 0
        %394 = vmatpush1.bf16.msra.mxu0 0
        %395 = vmatprep.mubr.bf16.mxu0 0
        %396 = vmatmul.mubr.bf16.gmra.mrb[0].mxu0 %v309
        %v397 = vpop.f32.mrb[0].mxu0
        %v398 = vadd.f32 %v214, %v397
        %v399 = vpop.f32.mrb[0].mxu0
        %v400 = vpop.f32.mrb[0].mxu0
        %v401 = vadd.f32 %v214, %v400
        %v402 = vpop.f32.mrb[0].mxu0
        %403 = vmatprep.mubr.bf16.mxu0 0
        %404 = vmatmul.mubr.bf16.gmra.mrb[0].mxu0 %v312
        %v405 = vpop.f32.mrb[0].mxu0
        %v406 = vadd.f32 %v214, %v405
        %v407 = vpop.f32.mrb[0].mxu0
        %v408 = vpop.f32.mrb[0].mxu0
        %v409 = vadd.f32 %v214, %v408
        %v410 = vpop.f32.mrb[0].mxu0
        %411 = vmatprep.mubr.bf16.mxu0 0
        %412 = vmatmul.mubr.bf16.gmra.mrb[0].mxu0 %v315
        %v413 = vpop.f32.mrb[0].mxu0
        %v414 = vadd.f32 %v214, %v413
        %v415 = vpop.f32.mrb[0].mxu0
        %v416 = vpop.f32.mrb[0].mxu0
        %v417 = vadd.f32 %v214, %v416
        %v418 = vpop.f32.mrb[0].mxu0
        %419 = vmatprep.mubr.bf16.mxu0 0
        %420 = vmatmul.mubr.bf16.gmra.mrb[0].mxu0 %v318
        %v421 = vpop.f32.mrb[0].mxu0
        %v422 = vadd.f32 %v214, %v421
        %v423 = vpop.f32.mrb[0].mxu0
        %v424 = vpop.f32.mrb[0].mxu0
        %v425 = vadd.f32 %v214, %v424
        %v426 = vpop.f32.mrb[0].mxu0
        %427 = vmatprep.mubr.bf16.mxu0 0
        %428 = vmatmul.mubr.bf16.gmra.mrb[0].mxu0 %v321
        %v429 = vpop.f32.mrb[0].mxu0
        %v430 = vadd.f32 %v214, %v429
        %v431 = vpop.f32.mrb[0].mxu0
        %v432 = vpop.f32.mrb[0].mxu0
        %v433 = vadd.f32 %v214, %v432
        %v434 = vpop.f32.mrb[0].mxu0
        %435 = vmatprep.mubr.bf16.mxu0 0
        %436 = vmatmul.mubr.bf16.gmra.mrb[0].mxu0 %v324
        %v437 = vpop.f32.mrb[0].mxu0
        %v438 = vadd.f32 %v214, %v437
        %v439 = vpop.f32.mrb[0].mxu0
        %v440 = vpop.f32.mrb[0].mxu0
        %v441 = vadd.f32 %v214, %v440
        %v442 = vpop.f32.mrb[0].mxu0
        %443 = vmatprep.mubr.bf16.mxu0 0
        %444 = vmatmul.mubr.bf16.gmra.mrb[0].mxu0 %v327
        %v445 = vpop.f32.mrb[0].mxu0
        %v446 = vadd.f32 %v214, %v445
        %v447 = vpop.f32.mrb[0].mxu0
        %v448 = vpop.f32.mrb[0].mxu0
        %v449 = vadd.f32 %v214, %v448
        %v450 = vpop.f32.mrb[0].mxu0
        %451 = vmatprep.mubr.bf16.mxu0 0
        %452 = vmatmul.mubr.bf16.gmra.mrb[0].mxu0 %v330
        %v453 = vpop.f32.mrb[0].mxu0
        %v454 = vadd.f32 %v214, %v453
        %v455 = vpop.f32.mrb[0].mxu0
        %v456 = vpop.f32.mrb[0].mxu0
        %v457 = vadd.f32 %v214, %v456
        %v458 = vpop.f32.mrb[0].mxu0
        %459 = vmatprep.mubr.bf16.mxu0 0
        %460 = vmatmul.mubr.bf16.gmra.mrb[0].mxu0 %v333
        %v461 = vpop.f32.mrb[0].mxu0
        %v462 = vadd.f32 %v214, %v461
        %v463 = vpop.f32.mrb[0].mxu0
        %v464 = vpop.f32.mrb[0].mxu0
        %v465 = vadd.f32 %v214, %v464
        %v466 = vpop.f32.mrb[0].mxu0
        %467 = vmatprep.mubr.bf16.mxu0 0
        %468 = vmatmul.mubr.bf16.gmra.mrb[0].mxu0 %v336
        %v469 = vpop.f32.mrb[0].mxu0
        %v470 = vadd.f32 %v214, %v469
        %v471 = vpop.f32.mrb[0].mxu0
        %v472 = vpop.f32.mrb[0].mxu0
        %v473 = vadd.f32 %v214, %v472
        %v474 = vpop.f32.mrb[0].mxu0
        %475 = vmatprep.mubr.bf16.mxu0 0
        %476 = vmatmul.mubr.bf16.gmra.mrb[0].mxu0 %v339
        %v477 = vpop.f32.mrb[0].mxu0
        %v478 = vadd.f32 %v214, %v477
        %v479 = vpop.f32.mrb[0].mxu0
        %v480 = vpop.f32.mrb[0].mxu0
        %v481 = vadd.f32 %v214, %v480
        %v482 = vpop.f32.mrb[0].mxu0
        %483 = vmatprep.mubr.bf16.mxu0 0
        %484 = vmatmul.mubr.bf16.gmra.mrb[0].mxu0 %v342
        %v485 = vpop.f32.mrb[0].mxu0
        %v486 = vadd.f32 %v214, %v485
        %v487 = vpop.f32.mrb[0].mxu0
        %v488 = vpop.f32.mrb[0].mxu0
        %v489 = vadd.f32 %v214, %v488
        %v490 = vpop.f32.mrb[0].mxu0
        %491 = vmatprep.mubr.bf16.mxu0 0
        %492 = vmatmul.mubr.bf16.gmra.mrb[0].mxu0 %v345
        %v493 = vpop.f32.mrb[0].mxu0
        %v494 = vadd.f32 %v214, %v493
        %v495 = vpop.f32.mrb[0].mxu0
        %v496 = vpop.f32.mrb[0].mxu0
        %v497 = vadd.f32 %v214, %v496
        %v498 = vpop.f32.mrb[0].mxu0
        %499 = vmatprep.mubr.bf16.mxu0 0
        %500 = vmatmul.mubr.bf16.gmra.mrb[0].mxu0 %v348
        %v501 = vpop.f32.mrb[0].mxu0
        %v502 = vadd.f32 %v214, %v501
        %v503 = vpop.f32.mrb[0].mxu0
        %v504 = vpop.f32.mrb[0].mxu0
        %v505 = vadd.f32 %v214, %v504
        %v506 = vpop.f32.mrb[0].mxu0
        %507 = vmatprep.mubr.bf16.mxu0 0
        %508 = vmatmul.mubr.bf16.gmra.mrb[0].mxu0 %v351
        %v509 = vpop.f32.mrb[0].mxu0
        %v510 = vadd.f32 %v214, %v509
        %v511 = vpop.f32.mrb[0].mxu0
        %v512 = vpop.f32.mrb[0].mxu0
        %v513 = vadd.f32 %v214, %v512
        %v514 = vpop.f32.mrb[0].mxu0
        %515 = vmatprep.mubr.bf16.mxu0 0
        %516 = vmatmul.mubr.bf16.gmra.mrb[0].mxu0 %v354
        %v517 = vpop.f32.mrb[0].mxu0
        %v518 = vadd.f32 %v214, %v517
        %v519 = vpop.f32.mrb[0].mxu0
        %v520 = vpop.f32.mrb[0].mxu0
        %v521 = vadd.f32 %v214, %v520
        %v522 = vpop.f32.mrb[0].mxu0
        %523 = vdwg.mxu0
        %v524 = vmax.f32 %v398, 0.0
        %v525 = vmax.f32 %v401, 0.0
        %v526 = vmax.f32 %v406, 0.0
        %v527 = vmax.f32 %v409, 0.0
        %v528 = vmax.f32 %v414, 0.0
        %v529 = vmax.f32 %v417, 0.0
        %v530 = vmax.f32 %v422, 0.0
        %v531 = vmax.f32 %v425, 0.0
        %v532 = vmax.f32 %v430, 0.0
        %v533 = vmax.f32 %v433, 0.0
        %v534 = vmax.f32 %v438, 0.0
        %v535 = vmax.f32 %v441, 0.0
        %v536 = vmax.f32 %v446, 0.0
        %v537 = vmax.f32 %v449, 0.0
        %v538 = vmax.f32 %v454, 0.0
        %v539 = vmax.f32 %v457, 0.0
        %v540 = vmax.f32 %v462, 0.0
        %v541 = vmax.f32 %v465, 0.0
        %v542 = vmax.f32 %v470, 0.0
        %v543 = vmax.f32 %v473, 0.0
        %v544 = vmax.f32 %v478, 0.0
        %v545 = vmax.f32 %v481, 0.0
        %v546 = vmax.f32 %v486, 0.0
        %v547 = vmax.f32 %v489, 0.0
        %v548 = vmax.f32 %v494, 0.0
        %v549 = vmax.f32 %v497, 0.0
        %v550 = vmax.f32 %v502, 0.0
        %v551 = vmax.f32 %v505, 0.0
        %v552 = vmax.f32 %v510, 0.0
        %v553 = vmax.f32 %v513, 0.0
        %v554 = vmax.f32 %v518, 0.0
        %v555 = vmax.f32 %v521, 0.0
        %v556 = vpack.c.bf16 %v525, %v524
        %v557 = vpack.c.bf16 %v527, %v526
        %v558 = vpack.c.bf16 %v529, %v528
        %v559 = vpack.c.bf16 %v531, %v530
        %v560 = vpack.c.bf16 %v533, %v532
        %v561 = vpack.c.bf16 %v535, %v534
        %v562 = vpack.c.bf16 %v537, %v536
        %v563 = vpack.c.bf16 %v539, %v538
        %v564 = vpack.c.bf16 %v541, %v540
        %v565 = vpack.c.bf16 %v543, %v542
        %v566 = vpack.c.bf16 %v545, %v544
        %v567 = vpack.c.bf16 %v547, %v546
        %v568 = vpack.c.bf16 %v549, %v548
        %v569 = vpack.c.bf16 %v551, %v550
        %v570 = vpack.c.bf16 %v553, %v552
        %v571 = vpack.c.bf16 %v555, %v554
        %v588 = vunpack.c.l.b16 %v556
        %v589 = vunpack.c.h.b16 %v556
        %v590 = vunpack.c.l.b16 %v557
        %v591 = vunpack.c.h.b16 %v557
        %v592 = vunpack.c.l.b16 %v558
        %v593 = vunpack.c.h.b16 %v558
        %v594 = vunpack.c.l.b16 %v559
        %v595 = vunpack.c.h.b16 %v559
        %v596 = vunpack.c.l.b16 %v560
        %v597 = vunpack.c.h.b16 %v560
        %v598 = vunpack.c.l.b16 %v561
        %v599 = vunpack.c.h.b16 %v561
        %v600 = vunpack.c.l.b16 %v562
        %v601 = vunpack.c.h.b16 %v562
        %v602 = vunpack.c.l.b16 %v563
        %v603 = vunpack.c.h.b16 %v563
        %v604 = vunpack.c.l.b16 %v564
        %v605 = vunpack.c.h.b16 %v564
        %v606 = vunpack.c.l.b16 %v565
        %v607 = vunpack.c.h.b16 %v565
        %v608 = vunpack.c.l.b16 %v566
        %v609 = vunpack.c.h.b16 %v566
        %v610 = vunpack.c.l.b16 %v567
        %v611 = vunpack.c.h.b16 %v567
        %v612 = vunpack.c.l.b16 %v568
        %v613 = vunpack.c.h.b16 %v568
        %v614 = vunpack.c.l.b16 %v569
        %v615 = vunpack.c.h.b16 %v569
        %v616 = vunpack.c.l.b16 %v570
        %v617 = vunpack.c.h.b16 %v570
        %v618 = vunpack.c.l.b16 %v571
        %v619 = vunpack.c.h.b16 %v571
        %v620 = vpack.c.b16 %v588, %v588
        %v621 = vpack.c.b16 %v589, %v589
        %v622 = vpack.c.b16 %v590, %v590
        %v623 = vpack.c.b16 %v591, %v591
        %v624 = vpack.c.b16 %v592, %v592
        %v625 = vpack.c.b16 %v593, %v593
        %v626 = vpack.c.b16 %v594, %v594
        %v627 = vpack.c.b16 %v595, %v595
        %v628 = vpack.c.b16 %v596, %v596
        %v629 = vpack.c.b16 %v597, %v597
        %v630 = vpack.c.b16 %v598, %v598
        %v631 = vpack.c.b16 %v599, %v599
        %v632 = vpack.c.b16 %v600, %v600
        %v633 = vpack.c.b16 %v601, %v601
        %v634 = vpack.c.b16 %v602, %v602
        %v635 = vpack.c.b16 %v603, %v603
        %v636 = vpack.c.b16 %v604, %v604
        %v637 = vpack.c.b16 %v605, %v605
        %v638 = vpack.c.b16 %v606, %v606
        %v639 = vpack.c.b16 %v607, %v607
        %v640 = vpack.c.b16 %v608, %v608
        %v641 = vpack.c.b16 %v609, %v609
        %v642 = vpack.c.b16 %v610, %v610
        %v643 = vpack.c.b16 %v611, %v611
        %v644 = vpack.c.b16 %v612, %v612
        %v645 = vpack.c.b16 %v613, %v613
        %v646 = vpack.c.b16 %v614, %v614
        %v647 = vpack.c.b16 %v615, %v615
        %v648 = vpack.c.b16 %v616, %v616
        %v649 = vpack.c.b16 %v617, %v617
        %v650 = vpack.c.b16 %v618, %v618
        %v651 = vpack.c.b16 %v619, %v619
        %684 = vst [vmem:[%s164] sm:$0xf] %v620
        %685 = vst [vmem:[%s164 + $0x4] sm:$0xf] %v621
        %686 = vst [vmem:[%s164 + $0x8] sm:$0xf] %v622
        %687 = vst [vmem:[%s164 + $0xc] sm:$0xf] %v623
        %688 = vst [vmem:[%s164 + $0x10] sm:$0xf] %v624
        %689 = vst [vmem:[%s164 + $0x14] sm:$0xf] %v625
        %690 = vst [vmem:[%s164 + $0x18] sm:$0xf] %v626
        %691 = vst [vmem:[%s164 + $0x1c] sm:$0xf] %v627
        %692 = vst [vmem:[%s164 + $0x20] sm:$0xf] %v628
        %693 = vst [vmem:[%s164 + $0x24] sm:$0xf] %v629
        %694 = vst [vmem:[%s164 + $0x28] sm:$0xf] %v630
        %695 = vst [vmem:[%s164 + $0x2c] sm:$0xf] %v631
        %696 = vst [vmem:[%s164 + $0x30] sm:$0xf] %v632
        %697 = vst [vmem:[%s164 + $0x34] sm:$0xf] %v633
        %698 = vst [vmem:[%s164 + $0x38] sm:$0xf] %v634
        %699 = vst [vmem:[%s164 + $0x3c] sm:$0xf] %v635
        %700 = vst [vmem:[%s164 + $0x40] sm:$0xf] %v636
        %701 = vst [vmem:[%s164 + $0x44] sm:$0xf] %v637
        %702 = vst [vmem:[%s164 + $0x48] sm:$0xf] %v638
        %703 = vst [vmem:[%s164 + $0x4c] sm:$0xf] %v639
        %704 = vst [vmem:[%s164 + $0x50] sm:$0xf] %v640
        %705 = vst [vmem:[%s164 + $0x54] sm:$0xf] %v641
        %706 = vst [vmem:[%s164 + $0x58] sm:$0xf] %v642
        %707 = vst [vmem:[%s164 + $0x5c] sm:$0xf] %v643
        %708 = vst [vmem:[%s164 + $0x60] sm:$0xf] %v644
        %709 = vst [vmem:[%s164 + $0x64] sm:$0xf] %v645
        %710 = vst [vmem:[%s164 + $0x68] sm:$0xf] %v646
        %711 = vst [vmem:[%s164 + $0x6c] sm:$0xf] %v647
        %712 = vst [vmem:[%s164 + $0x70] sm:$0xf] %v648
        %713 = vst [vmem:[%s164 + $0x74] sm:$0xf] %v649
        %714 = vst [vmem:[%s164 + $0x78] sm:$0xf] %v650
        %715 = vst [vmem:[%s164 + $0x7c] sm:$0xf] %v651
        %s716 = sand.u32 %s93, 1
        %s717 = scalar_lea.sflag [#allocation3], %s716
        %s718 = sand.u32 %s93, 1
        %s719 = smul.addr %s718, 128
        %s720 = scalar_lea.vmem [#allocation2], %s719
        // Predicated region
        $region33: #{fused_matmul.1} parent=31 // pred_check
          %p721 = pneg %p103
        $region34: #{fused_matmul.1} parent=31 // pred_check_branch
          %723 = sbr.rel (%p721) target = $region36
        $region35: #{fused_matmul.1} parent=31 // pred_region
          %s724 = smul.u32 32, %s17
          %s726 = ssub.s32 2048, 2048
          %727 = vsyncadd %s717, %s726
          %s728 = smul.addr %s724, 64
          %s729 = scalar_lea.hbm %s3, %s728
          %s730 = sshll.u32 %s720, 4
          %s731 = int_to_ptr.vmem [resolvable:$true] %s730
          %736 = dma.vmem_to_hbm [thread:$0]  %s731, 2048, %s729, %s717, 64, 64, 4
        $region36: #{fused_matmul.1} parent=31 // pred_fallthru
          _
      $region32: #{fused_matmul.1} parent=5 // pred_fallthru
        _
      %p737 = scmp.le.s32.totalorder 2, %s12
      // Predicated region
      $region37: #{fused_matmul.1} parent=5 // pred_check
        %p738 = pneg %p737
      $region38: #{fused_matmul.1} parent=5 // pred_check_branch
        %740 = sbr.rel (%p738) target = $region40
      $region39: #{fused_matmul.1} parent=5 // pred_region
        %s741 = ssub.s32 %s12, 2
        // Predicated region
        $region41: #{fused_matmul.1} parent=39 // pred_check
          %p742 = pneg %p109
        $region42: #{fused_matmul.1} parent=39 // pred_check_branch
          %744 = sbr.rel (%p742) target = $region44
        $region43: #{fused_matmul.1} parent=39 // pred_region
          %s745 = sand.u32 %s94, 1
          %s746 = scalar_lea.sflag [#allocation3], %s745
          %s747 = sand.u32 %s94, 1
          %s748 = smul.addr %s747, 128
          %s749 = scalar_lea.vmem [#allocation2], %s748
          %750 = dma.done %s746, 2048
        $region44: #{fused_matmul.1} parent=39 // pred_fallthru
          _
      $region40: #{fused_matmul.1} parent=5 // pred_fallthru
        _
    $region6: #{fused_matmul.1} parent=1 // loop_footer
      %s16 = sadd.s32 1, %s12
    $region7: #{fused_matmul.1} parent=1 // loop_footer_branch
      %11 = sbr.rel target = $region3
    $region8: #{fused_matmul.1} parent=1 // loop_exit
      _
    %751 = vsyncpa [#allocation3], 1
    %s752 = scalar_lea.sflag [#allocation3], 1
    %753 = vsyncpa %s752, 1

</llo_original>
